<compile_context>
chip_gen: v7x
topology: tpu7x:2x2x1
jax: 0.10.0
libtpu: 0.0.40
codegen_flags: <defaults>
</compile_context>

<pallas_src>
import jax
import jax.numpy as jnp
from jax.experimental import pallas as pl
from jax.experimental.pallas import tpu as pltpu

LATENT_SIZE = 64
HIDDEN_SIZE = 256
IMAGE_SIZE = 784
IMAGE_PADDED = 896  # 7 * 128 -> lane-dense output layout


def _round_up(n, m):
    return ((n + m - 1) // m) * m


def decoder_kernel(x_ref, w1_ref, b1_ref, w2_ref, b2_ref, o_ref):
    # fc1: bf16 MXU matmul, f32 accumulation; bias + ReLU in f32.
    h = jnp.dot(x_ref[...], w1_ref[...], preferred_element_type=jnp.float32)
    h = jnp.maximum(h + b1_ref[...], 0.0)
    # fc2: cast activations to bf16 for the MXU, accumulate in f32.
    y = jnp.dot(h.astype(jnp.bfloat16), w2_ref[...],
                preferred_element_type=jnp.float32)
    y = jax.nn.sigmoid(y + b2_ref[...])          # f32 sigmoid (EUP)
    o_ref[...] = y.astype(o_ref.dtype)


def decoder_forward(x, w1, b1, w2, b2, *, block_b=512):
    """x: [B, 64] f32; w1: [64, 256]; b1: [256]; w2: [256, 784]; b2: [784]."""
    B = x.shape[0]

    # Batch tile: multiple of 8 sublanes, capped at block_b; pad B to a
    # multiple of the tile so the grid divides evenly.
    tb = min(block_b, _round_up(B, 8))
    b_pad = _round_up(B, tb)

    # bf16 matmul operands; biases stay f32. Pad image dim to 896 lanes.
    x_p = jnp.zeros((b_pad, LATENT_SIZE), jnp.bfloat16).at[:B].set(
        x.astype(jnp.bfloat16))
    w1_b = w1.astype(jnp.bfloat16)
    w2_b = jnp.zeros((HIDDEN_SIZE, IMAGE_PADDED), jnp.bfloat16).at[
        :, :IMAGE_SIZE].set(w2.astype(jnp.bfloat16))
    b1_f = b1.reshape(1, HIDDEN_SIZE).astype(jnp.float32)
    b2_f = jnp.zeros((1, IMAGE_PADDED), jnp.float32).at[:, :IMAGE_SIZE].set(
        b2.reshape(1, IMAGE_SIZE).astype(jnp.float32))

    grid = (b_pad // tb,)
    flops = 2 * b_pad * (LATENT_SIZE * HIDDEN_SIZE
                         + HIDDEN_SIZE * IMAGE_PADDED)
    bytes_accessed = (x_p.size * 2 + w1_b.size * 2 + w2_b.size * 2
                      + b1_f.size * 4 + b2_f.size * 4
                      + b_pad * IMAGE_PADDED * 4)

    out_p = pl.pallas_call(
        decoder_kernel,
        out_shape=jax.ShapeDtypeStruct((b_pad, IMAGE_PADDED), jnp.float32),
        grid_spec=pl.GridSpec(
            grid=grid,
            in_specs=[
                # Activations: tiled over the batch grid axis.
                pl.BlockSpec((tb, LATENT_SIZE), lambda i: (i, 0)),
                # Weights / biases: constant block index -> VMEM-resident
                # across batch tiles (fetched once).
                pl.BlockSpec((LATENT_SIZE, HIDDEN_SIZE), lambda i: (0, 0)),
                pl.BlockSpec((1, HIDDEN_SIZE), lambda i: (0, 0)),
                pl.BlockSpec((HIDDEN_SIZE, IMAGE_PADDED), lambda i: (0, 0)),
                pl.BlockSpec((1, IMAGE_PADDED), lambda i: (0, 0)),
            ],
            out_specs=pl.BlockSpec((tb, IMAGE_PADDED), lambda i: (i, 0)),
        ),
        compiler_params=pltpu.CompilerParams(
            dimension_semantics=("parallel",)),
        cost_estimate=pl.CostEstimate(
            flops=flops,
            transcendentals=b_pad * IMAGE_PADDED,
            bytes_accessed=bytes_accessed),
    )(x_p, w1_b, b1_f, w2_b, b2_f)

    return out_p[:B, :IMAGE_SIZE]


def init_params(key):
    """Deterministic init mimicking nn.Linear default (uniform +/- 1/sqrt(fan_in))."""
    k1, k2, k3, k4 = jax.random.split(key, 4)
    bound1 = 1.0 / (LATENT_SIZE ** 0.5)
    bound2 = 1.0 / (HIDDEN_SIZE ** 0.5)
    w1 = jax.random.uniform(k1, (LATENT_SIZE, HIDDEN_SIZE), jnp.float32,
                            -bound1, bound1)
    b1 = jax.random.uniform(k2, (HIDDEN_SIZE,), jnp.float32, -bound1, bound1)
    w2 = jax.random.uniform(k3, (HIDDEN_SIZE, IMAGE_SIZE), jnp.float32,
                            -bound2, bound2)
    b2 = jax.random.uniform(k4, (IMAGE_SIZE,), jnp.float32, -bound2, bound2)
    return w1, b1, w2, b2


def decoder_ref(x, w1, b1, w2, b2):
    h = jnp.maximum(x @ w1 + b1[None, :], 0.0)
    return jax.nn.sigmoid(h @ w2 + b2[None, :])


if __name__ == "__main__":
    key = jax.random.PRNGKey(0)
    kx, kp = jax.random.split(key)

    batch = 8
    x = jax.random.normal(kx, (batch, LATENT_SIZE), dtype=jnp.float32)
    w1, b1, w2, b2 = init_params(kp)

    out = decoder_forward(x, w1, b1, w2, b2)
    out = jax.block_until_ready(out)

    ref = decoder_ref(x, w1, b1, w2, b2)
    assert out.shape == (batch, IMAGE_SIZE)
    # bf16 matmul operands (f32 accumulation / activations): sigmoid outputs
    # match the f32 reference to ~3e-3; use a 1e-2 tolerance for robustness.
    assert jnp.allclose(out, ref, atol=1e-2, rtol=0.0), "mismatch vs reference"
    assert bool(jnp.isfinite(out).all()), "non-finite output"

    print("KERNEL_OK")
</pallas_src>

<mosaic_0001>
module attributes {stable_mosaic.version = 11 : i64} {
  func.func @decoder_kernel(%arg0: i32, %arg1: memref<8x64xbf16, #tpu.memory_space<vmem>>, %arg2: memref<64x256xbf16, #tpu.memory_space<vmem>>, %arg3: memref<1x256xf32, #tpu.memory_space<vmem>>, %arg4: memref<256x896xbf16, #tpu.memory_space<vmem>>, %arg5: memref<1x896xf32, #tpu.memory_space<vmem>>, %arg6: memref<8x896xf32, #tpu.memory_space<vmem>>) attributes {dimension_semantics = [#tpu.dimension_semantics<parallel>], iteration_bounds = array<i64: 1>, scalar_prefetch = 0 : i64, scratch_operands = 0 : i64, tpu.core_type = #tpu.core_type<tc>, window_params = [{transform_indices = @transform_0, window_bounds = array<i64: 8, 64>}, {pipeline_mode = #tpu.pipeline_mode<synchronous>, transform_indices = @transform_1, window_bounds = array<i64: 64, 256>}, {pipeline_mode = #tpu.pipeline_mode<synchronous>, transform_indices = @transform_2, window_bounds = array<i64: 1, 256>}, {pipeline_mode = #tpu.pipeline_mode<synchronous>, transform_indices = @transform_3, window_bounds = array<i64: 256, 896>}, {pipeline_mode = #tpu.pipeline_mode<synchronous>, transform_indices = @transform_4, window_bounds = array<i64: 1, 896>}, {transform_indices = @transform_5, window_bounds = array<i64: 8, 896>}]} {
    %c0 = arith.constant 0 : index
    %c0_0 = arith.constant 0 : index
    %0 = vector.load %arg1[%c0, %c0_0] : memref<8x64xbf16, #tpu.memory_space<vmem>>, vector<8x64xbf16>
    %c0_1 = arith.constant 0 : index
    %c0_2 = arith.constant 0 : index
    %1 = vector.load %arg2[%c0_1, %c0_2] : memref<64x256xbf16, #tpu.memory_space<vmem>>, vector<64x256xbf16>
    %cst = arith.constant dense<0.000000e+00> : vector<8x256xf32>
    %2 = tpu.matmul %0, %1, %cst {dimension_numbers = #tpu.dot_dimension_numbers<[1], [0], [0], [1], [0, 0, 1, 1], [], []>} : vector<8x64xbf16>, vector<64x256xbf16>, vector<8x256xf32> -> vector<8x256xf32>
    %c0_3 = arith.constant 0 : index
    %c0_4 = arith.constant 0 : index
    %3 = vector.load %arg3[%c0_3, %c0_4] : memref<1x256xf32, #tpu.memory_space<vmem>>, vector<1x256xf32>
    %4 = vector.broadcast %3 : vector<1x256xf32> to vector<8x256xf32>
    %5 = arith.addf %2, %4 : vector<8x256xf32>
    %cst_5 = arith.constant 0.000000e+00 : f32
    %6 = vector.broadcast %cst_5 : f32 to vector<8x256xf32>
    %7 = arith.maximumf %5, %6 : vector<8x256xf32>
    %8 = arith.truncf %7 : vector<8x256xf32> to vector<8x256xbf16>
    %c0_6 = arith.constant 0 : index
    %c0_7 = arith.constant 0 : index
    %9 = vector.load %arg4[%c0_6, %c0_7] : memref<256x896xbf16, #tpu.memory_space<vmem>>, vector<256x896xbf16>
    %cst_8 = arith.constant dense<0.000000e+00> : vector<8x896xf32>
    %10 = tpu.matmul %8, %9, %cst_8 {dimension_numbers = #tpu.dot_dimension_numbers<[1], [0], [0], [1], [0, 0, 1, 1], [], []>} : vector<8x256xbf16>, vector<256x896xbf16>, vector<8x896xf32> -> vector<8x896xf32>
    %c0_9 = arith.constant 0 : index
    %c0_10 = arith.constant 0 : index
    %11 = vector.load %arg5[%c0_9, %c0_10] : memref<1x896xf32, #tpu.memory_space<vmem>>, vector<1x896xf32>
    %12 = vector.broadcast %11 : vector<1x896xf32> to vector<8x896xf32>
    %13 = arith.addf %10, %12 : vector<8x896xf32>
    %14 = arith.negf %13 : vector<8x896xf32>
    %15 = math.exp %14 : vector<8x896xf32>
    %cst_11 = arith.constant 1.000000e+00 : f32
    %16 = vector.broadcast %cst_11 : f32 to vector<8x896xf32>
    %17 = arith.addf %16, %15 : vector<8x896xf32>
    %18 = arith.divf %16, %17 : vector<8x896xf32>
    %c0_12 = arith.constant 0 : index
    %c0_13 = arith.constant 0 : index
    %19 = vector.load %arg6[%c0_12, %c0_13] : memref<8x896xf32, #tpu.memory_space<vmem>>, vector<8x896xf32>
    tpu.vector_store %arg6[%c0_12, %c0_13], %18 {strides = array<i32>} : memref<8x896xf32, #tpu.memory_space<vmem>>, vector<8x896xf32>,
    return
  }
  func.func @transform_0(%arg0: i32) -> (i32, i32) {
    %c0_i32 = arith.constant 0 : i32
    %c0_i32_0 = arith.constant 0 : i32
    return %arg0, %c0_i32 : i32, i32
  }
  func.func @transform_1(%arg0: i32) -> (i32, i32) {
    %c0_i32 = arith.constant 0 : i32
    %c0_i32_0 = arith.constant 0 : i32
    %c0_i32_1 = arith.constant 0 : i32
    return %c0_i32, %c0_i32_0 : i32, i32
  }
  func.func @transform_2(%arg0: i32) -> (i32, i32) {
    %c0_i32 = arith.constant 0 : i32
    %c0_i32_0 = arith.constant 0 : i32
    %c0_i32_1 = arith.constant 0 : i32
    return %c0_i32, %c0_i32_0 : i32, i32
  }
  func.func @transform_3(%arg0: i32) -> (i32, i32) {
    %c0_i32 = arith.constant 0 : i32
    %c0_i32_0 = arith.constant 0 : i32
    %c0_i32_1 = arith.constant 0 : i32
    return %c0_i32, %c0_i32_0 : i32, i32
  }
  func.func @transform_4(%arg0: i32) -> (i32, i32) {
    %c0_i32 = arith.constant 0 : i32
    %c0_i32_0 = arith.constant 0 : i32
    %c0_i32_1 = arith.constant 0 : i32
    return %c0_i32, %c0_i32_0 : i32, i32
  }
  func.func @transform_5(%arg0: i32) -> (i32, i32) {
    %c0_i32 = arith.constant 0 : i32
    %c0_i32_0 = arith.constant 0 : i32
    return %arg0, %c0_i32 : i32, i32
  }
}

</mosaic_0001>

<llo_original>
// kernel: tpu_custom_call.1
$region0: #{tpu_custom_call.1}
  #allocation0 [shape = 'u32[]', space=smem, size = 0x4, offset = 0x4, fixed_abs, tag = 'smem constant byte address 0x4 - core index']
  #allocation1 [shape = 'u32[144,128]{1,0:T(1,128)}', space=vmem, size = 0x12000, scoped, tag = 'internal scratch']
  %s0 = inlined_call_operand.hbm [shape: bf16[8,64], index: 0, kind: input, shape index: {}]
  %s1 = inlined_call_operand.hbm [shape: bf16[64,256], index: 1, kind: input, shape index: {}]
  %s2 = inlined_call_operand.vmem [shape: f32[1,256], index: 2, kind: input, shape index: {}]
  %s3 = inlined_call_operand.hbm [shape: bf16[256,896], index: 3, kind: input, shape index: {}]
  %s4 = inlined_call_operand.vmem [shape: f32[1,896], index: 4, kind: input, shape index: {}]
  %s5 = inlined_call_operand.hbm [shape: f32[8,896], index: 5, kind: output, shape index: {}]
  %s6 = sld [smem:[#allocation0]]
  $region42: #{tpu_custom_call.1} parent=0
    _
  %s8 = ssub.s32 1, %s6
  %s9 = scalar_select 0, %s8, %s6
  $region1: #{tpu_custom_call.1} parent=0
    #allocation2 [shape = 'u8[2048]{0}', space=vmem, size = 0x800, scoped, tag = 'input window, operand 0, single buffered']
    #allocation3 [shape = 's32[1]{0}', space=sflag, size = 0x4, scoped, tag = 'scoped memory for tpu_custom_call.1']
    #allocation4 [shape = 's32[1]{0}', space=sflag, size = 0x4, scoped, tag = 'scoped memory for tpu_custom_call.1']
    #allocation5 [shape = 'u8[32768]{0}', space=vmem, size = 0x8000, scoped, tag = 'input window, operand 1, single buffered']
    #allocation6 [shape = 's32[1]{0}', space=sflag, size = 0x4, scoped, tag = 'scoped memory for tpu_custom_call.1']
    #allocation7 [shape = 'u8[458752]{0}', space=vmem, size = 0x70000, scoped, tag = 'input window, operand 3, single buffered']
    #allocation8 [shape = 'u8[28672]{0}', space=vmem, size = 0x7000, scoped, tag = 'output window, operand 0, single buffered']
    %10 = vsyncpa [#allocation3], 0
    %11 = vsyncpa [#allocation6], 0
    %12 = vsyncpa [#allocation4], 0
    // Predicated region
    $region2: #{tpu_custom_call.1} parent=1 // pred_check
      _
    $region3: #{tpu_custom_call.1} parent=1 // pred_check_branch
      %14 = sbr.rel (0) target = $region5
    $region4: #{tpu_custom_call.1} parent=1 // pred_region
      %s16 = ssub.s32 64, 64
      %17 = vsyncadd [#allocation3], %s16
      %s19 = sshll.u32 [#allocation2], 4
      %s20 = int_to_ptr.vmem [resolvable:$true] %s19
      %22 = dma.hbm_to_vmem [thread:$0]  %s0, 64, %s20, [#allocation3]
    $region5: #{tpu_custom_call.1} parent=1 // pred_fallthru
      _
    // Predicated region
    $region6: #{tpu_custom_call.1} parent=1 // pred_check
      _
    $region7: #{tpu_custom_call.1} parent=1 // pred_check_branch
      %24 = sbr.rel (0) target = $region9
    $region8: #{tpu_custom_call.1} parent=1 // pred_region
      %s26 = ssub.s32 1024, 1024
      %27 = vsyncadd [#allocation6], %s26
      %s28 = sshll.u32 [#allocation5], 4
      %s29 = int_to_ptr.vmem [resolvable:$true] %s28
      %34 = dma.hbm_to_vmem [thread:$0]  %s1, 1024, %s29, [#allocation6], 128, 128, 8
    $region9: #{tpu_custom_call.1} parent=1 // pred_fallthru
      _
    // Predicated region
    $region10: #{tpu_custom_call.1} parent=1 // pred_check
      _
    $region11: #{tpu_custom_call.1} parent=1 // pred_check_branch
      %36 = sbr.rel (0) target = $region13
    $region12: #{tpu_custom_call.1} parent=1 // pred_region
      _
    $region13: #{tpu_custom_call.1} parent=1 // pred_fallthru
      _
    // Predicated region
    $region14: #{tpu_custom_call.1} parent=1 // pred_check
      _
    $region15: #{tpu_custom_call.1} parent=1 // pred_check_branch
      %38 = sbr.rel (0) target = $region17
    $region16: #{tpu_custom_call.1} parent=1 // pred_region
      %s40 = ssub.s32 14336, 14336
      %41 = vsyncadd [#allocation6], %s40
      %s42 = sshll.u32 [#allocation7], 4
      %s43 = int_to_ptr.vmem [resolvable:$true] %s42
      %48 = dma.hbm_to_vmem [thread:$0]  %s3, 14336, %s43, [#allocation6], 448, 448, 28
    $region17: #{tpu_custom_call.1} parent=1 // pred_fallthru
      _
    // Predicated region
    $region18: #{tpu_custom_call.1} parent=1 // pred_check
      _
    $region19: #{tpu_custom_call.1} parent=1 // pred_check_branch
      %50 = sbr.rel (0) target = $region21
    $region20: #{tpu_custom_call.1} parent=1 // pred_region
      _
    $region21: #{tpu_custom_call.1} parent=1 // pred_fallthru
      _
    // Predicated region
    $region22: #{tpu_custom_call.1} parent=1 // pred_check
      _
    $region23: #{tpu_custom_call.1} parent=1 // pred_check_branch
      %52 = sbr.rel (0) target = $region25
    $region24: #{tpu_custom_call.1} parent=1 // pred_region
      %53 = dma.done [#allocation3], 64
    $region25: #{tpu_custom_call.1} parent=1 // pred_fallthru
      _
    // Predicated region
    $region26: #{tpu_custom_call.1} parent=1 // pred_check
      _
    $region27: #{tpu_custom_call.1} parent=1 // pred_check_branch
      %55 = sbr.rel (0) target = $region29
    $region28: #{tpu_custom_call.1} parent=1 // pred_region
      %56 = dma.done [#allocation6], 1024
    $region29: #{tpu_custom_call.1} parent=1 // pred_fallthru
      _
    // Predicated region
    $region30: #{tpu_custom_call.1} parent=1 // pred_check
      _
    $region31: #{tpu_custom_call.1} parent=1 // pred_check_branch
      %58 = sbr.rel (0) target = $region33
    $region32: #{tpu_custom_call.1} parent=1 // pred_region
      %59 = dma.done [#allocation6], 14336
    $region33: #{tpu_custom_call.1} parent=1 // pred_fallthru
      _
    %v61 = vld [vmem:[#allocation2] sm:$0xf]
    %v62 = vld [vmem:[#allocation5] sm:$0xff]
    %v63 = vld [vmem:[#allocation5 + $0x8] sm:$0xff]
    %v64 = vld [vmem:[#allocation5 + $0x10] sm:$0xff]
    %v65 = vld [vmem:[#allocation5 + $0x18] sm:$0xff]
    %v66 = vld [vmem:[#allocation5 + $0x20] sm:$0xff]
    %v67 = vld [vmem:[#allocation5 + $0x28] sm:$0xff]
    %v68 = vld [vmem:[#allocation5 + $0x30] sm:$0xff]
    %v69 = vld [vmem:[#allocation5 + $0x38] sm:$0xff]
    %v70 = vld [vmem:[%s2] sm:$0x3]
    %v72 = vlaneseq
    %v73 = vshrl.u32 %v72, 7
    %v74 = vsub.s32 0, %v73
    %v75 = vrot.slane %v70, %v74
    %v76 = vlaneseq
    %v77 = vshrl.u32 %v76, 7
    %v78 = vsub.s32 1, %v77
    %v79 = vrot.slane %v70, %v78
    %v90 = vunpack.c.l.b16 %v62
    %v91 = vunpack.c.h.b16 %v62
    %v92 = vunpack.c.l.b16 %v63
    %v93 = vunpack.c.h.b16 %v63
    %v94 = vunpack.c.l.b16 %v64
    %v95 = vunpack.c.h.b16 %v64
    %v96 = vunpack.c.l.b16 %v65
    %v97 = vunpack.c.h.b16 %v65
    %v98 = vunpack.c.l.b16 %v66
    %v99 = vunpack.c.h.b16 %v66
    %v100 = vunpack.c.l.b16 %v67
    %v101 = vunpack.c.h.b16 %v67
    %v102 = vunpack.c.l.b16 %v68
    %v103 = vunpack.c.h.b16 %v68
    %v104 = vunpack.c.l.b16 %v69
    %v105 = vunpack.c.h.b16 %v69
    %v106 = vpack.c.b16 %v92, %v90
    %v107 = vpack.c.b16 %v93, %v91
    %v108 = vpack.c.b16 %v96, %v94
    %v109 = vpack.c.b16 %v97, %v95
    %v110 = vpack.c.b16 %v100, %v98
    %v111 = vpack.c.b16 %v101, %v99
    %v112 = vpack.c.b16 %v104, %v102
    %v113 = vpack.c.b16 %v105, %v103
    %vm122 = vcmask 523264
    %v124 = vsel %vm122, %v61, 0
    %126 = vmatprep.subr.bf16.mxu0 %v107
    %127 = vmatpush1.bf16.msra.mxu0 %v106
    %128 = vmatprep.subr.bf16.mxu0 %v109
    %129 = vmatpush1.bf16.msra.mxu0 %v108
    %130 = vmatprep.subr.bf16.mxu0 %v111
    %131 = vmatpush1.bf16.msra.mxu0 %v110
    %132 = vmatprep.subr.bf16.mxu0 %v113
    %133 = vmatpush1.bf16.msra.mxu0 %v112
    %134 = vmatprep.subr.bf16.mxu0 0
    %135 = vmatpush1.bf16.msra.mxu0 0
    %136 = vmatprep.subr.bf16.mxu0 0
    %137 = vmatpush1.bf16.msra.mxu0 0
    %138 = vmatprep.subr.bf16.mxu0 0
    %139 = vmatpush1.bf16.msra.mxu0 0
    %140 = vmatprep.subr.bf16.mxu0 0
    %141 = vmatpush1.bf16.msra.mxu0 0
    %142 = vmatprep.subr.bf16.mxu0 0
    %143 = vmatpush1.bf16.msra.mxu0 0
    %144 = vmatprep.subr.bf16.mxu0 0
    %145 = vmatpush1.bf16.msra.mxu0 0
    %146 = vmatprep.subr.bf16.mxu0 0
    %147 = vmatpush1.bf16.msra.mxu0 0
    %148 = vmatprep.subr.bf16.mxu0 0
    %149 = vmatpush1.bf16.msra.mxu0 0
    %150 = vmatprep.subr.bf16.mxu0 0
    %151 = vmatpush1.bf16.msra.mxu0 0
    %152 = vmatprep.subr.bf16.mxu0 0
    %153 = vmatpush1.bf16.msra.mxu0 0
    %154 = vmatprep.subr.bf16.mxu0 0
    %155 = vmatpush1.bf16.msra.mxu0 0
    %156 = vmatprep.subr.bf16.mxu0 0
    %157 = vmatpush1.bf16.msra.mxu0 0
    %158 = vmatprep.mubr.bf16.mxu0 0
    %159 = vmatmul.mubr.bf16.gmra.mrb[0].mxu0 %v124
    %v160 = vpop.f32.mrb[0].mxu0
    %v161 = vadd.f32 %v75, %v160
    %v162 = vpop.f32.mrb[0].mxu0
    %v163 = vadd.f32 %v79, %v162
    %v164 = vpop.f32.mrb[0].mxu0
    %v165 = vpop.f32.mrb[0].mxu0
    %166 = vdwg.mxu0
    %v167 = vmax.f32 %v161, 0.0
    %v168 = vmax.f32 %v163, 0.0
    %v169 = vpack.c.bf16 %v167, %v167
    %v170 = vpack.c.bf16 %v168, %v168
    %v171 = vld [vmem:[#allocation7] sm:$0xff]
    %v172 = vld [vmem:[#allocation7 + $0x8] sm:$0xff]
    %v173 = vld [vmem:[#allocation7 + $0x10] sm:$0xff]
    %v174 = vld [vmem:[#allocation7 + $0x18] sm:$0xf]
    %v175 = vld [vmem:[#allocation7 + $0x1c] sm:$0xff]
    %v176 = vld [vmem:[#allocation7 + $0x24] sm:$0xff]
    %v177 = vld [vmem:[#allocation7 + $0x2c] sm:$0xff]
    %v178 = vld [vmem:[#allocation7 + $0x34] sm:$0xf]
    %v179 = vld [vmem:[#allocation7 + $0x38] sm:$0xff]
    %v180 = vld [vmem:[#allocation7 + $0x40] sm:$0xff]
    %v181 = vld [vmem:[#allocation7 + $0x48] sm:$0xff]
    %v182 = vld [vmem:[#allocation7 + $0x50] sm:$0xf]
    %v183 = vld [vmem:[#allocation7 + $0x54] sm:$0xff]
    %v184 = vld [vmem:[#allocation7 + $0x5c] sm:$0xff]
    %v185 = vld [vmem:[#allocation7 + $0x64] sm:$0xff]
    %v186 = vld [vmem:[#allocation7 + $0x6c] sm:$0xf]
    %v187 = vld [vmem:[#allocation7 + $0x70] sm:$0xff]
    %v188 = vld [vmem:[#allocation7 + $0x78] sm:$0xff]
    %v189 = vld [vmem:[#allocation7 + $0x80] sm:$0xff]
    %v190 = vld [vmem:[#allocation7 + $0x88] sm:$0xf]
    %v191 = vld [vmem:[#allocation7 + $0x8c] sm:$0xff]
    %v192 = vld [vmem:[#allocation7 + $0x94] sm:$0xff]
    %v193 = vld [vmem:[#allocation7 + $0x9c] sm:$0xff]
    %v194 = vld [vmem:[#allocation7 + $0xa4] sm:$0xf]
    %v195 = vld [vmem:[#allocation7 + $0xa8] sm:$0xff]
    %v196 = vld [vmem:[#allocation7 + $0xb0] sm:$0xff]
    %v197 = vld [vmem:[#allocation7 + $0xb8] sm:$0xff]
    %v198 = vld [vmem:[#allocation7 + $0xc0] sm:$0xf]
    %v199 = vld [vmem:[#allocation7 + $0xc4] sm:$0xff]
    %v200 = vld [vmem:[#allocation7 + $0xcc] sm:$0xff]
    %v201 = vld [vmem:[#allocation7 + $0xd4] sm:$0xff]
    %v202 = vld [vmem:[#allocation7 + $0xdc] sm:$0xf]
    %v203 = vld [vmem:[#allocation7 + $0xe0] sm:$0xff]
    %v204 = vld [vmem:[#allocation7 + $0xe8] sm:$0xff]
    %v205 = vld [vmem:[#allocation7 + $0xf0] sm:$0xff]
    %v206 = vld [vmem:[#allocation7 + $0xf8] sm:$0xf]
    %v207 = vld [vmem:[#allocation7 + $0xfc] sm:$0xff]
    %v208 = vld [vmem:[#allocation7 + $0x104] sm:$0xff]
    %v209 = vld [vmem:[#allocation7 + $0x10c] sm:$0xff]
    %v210 = vld [vmem:[#allocation7 + $0x114] sm:$0xf]
    %v211 = vld [vmem:[#allocation7 + $0x118] sm:$0xff]
    %v212 = vld [vmem:[#allocation7 + $0x120] sm:$0xff]
    %v213 = vld [vmem:[#allocation7 + $0x128] sm:$0xff]
    %v214 = vld [vmem:[#allocation7 + $0x130] sm:$0xf]
    %v215 = vld [vmem:[#allocation7 + $0x134] sm:$0xff]
    %v216 = vld [vmem:[#allocation7 + $0x13c] sm:$0xff]
    %v217 = vld [vmem:[#allocation7 + $0x144] sm:$0xff]
    %v218 = vld [vmem:[#allocation7 + $0x14c] sm:$0xf]
    %v219 = vld [vmem:[#allocation7 + $0x150] sm:$0xff]
    %v220 = vld [vmem:[#allocation7 + $0x158] sm:$0xff]
    %v221 = vld [vmem:[#allocation7 + $0x160] sm:$0xff]
    %v222 = vld [vmem:[#allocation7 + $0x168] sm:$0xf]
    %v223 = vld [vmem:[#allocation7 + $0x16c] sm:$0xff]
    %v224 = vld [vmem:[#allocation7 + $0x174] sm:$0xff]
    %v225 = vld [vmem:[#allocation7 + $0x17c] sm:$0xff]
    %v226 = vld [vmem:[#allocation7 + $0x184] sm:$0xf]
    %v227 = vld [vmem:[#allocation7 + $0x188] sm:$0xff]
    %v228 = vld [vmem:[#allocation7 + $0x190] sm:$0xff]
    %v229 = vld [vmem:[#allocation7 + $0x198] sm:$0xff]
    %v230 = vld [vmem:[#allocation7 + $0x1a0] sm:$0xf]
    %v231 = vld [vmem:[#allocation7 + $0x1a4] sm:$0xff]
    %v232 = vld [vmem:[#allocation7 + $0x1ac] sm:$0xff]
    %v233 = vld [vmem:[#allocation7 + $0x1b4] sm:$0xff]
    %v234 = vld [vmem:[#allocation7 + $0x1bc] sm:$0xf]
    %v235 = vld [vmem:[#allocation7 + $0x1c0] sm:$0xff]
    %v236 = vld [vmem:[#allocation7 + $0x1c8] sm:$0xff]
    %v237 = vld [vmem:[#allocation7 + $0x1d0] sm:$0xff]
    %v238 = vld [vmem:[#allocation7 + $0x1d8] sm:$0xf]
    %v239 = vld [vmem:[#allocation7 + $0x1dc] sm:$0xff]
    %v240 = vld [vmem:[#allocation7 + $0x1e4] sm:$0xff]
    %v241 = vld [vmem:[#allocation7 + $0x1ec] sm:$0xff]
    %v242 = vld [vmem:[#allocation7 + $0x1f4] sm:$0xf]
    %v243 = vld [vmem:[#allocation7 + $0x1f8] sm:$0xff]
    %v244 = vld [vmem:[#allocation7 + $0x200] sm:$0xff]
    %v245 = vld [vmem:[#allocation7 + $0x208] sm:$0xff]
    %v246 = vld [vmem:[#allocation7 + $0x210] sm:$0xf]
    %v247 = vld [vmem:[#allocation7 + $0x214] sm:$0xff]
    %v248 = vld [vmem:[#allocation7 + $0x21c] sm:$0xff]
    %v249 = vld [vmem:[#allocation7 + $0x224] sm:$0xff]
    %v250 = vld [vmem:[#allocation7 + $0x22c] sm:$0xf]
    %v251 = vld [vmem:[#allocation7 + $0x230] sm:$0xff]
    %v252 = vld [vmem:[#allocation7 + $0x238] sm:$0xff]
    %v253 = vld [vmem:[#allocation7 + $0x240] sm:$0xff]
    %v254 = vld [vmem:[#allocation7 + $0x248] sm:$0xf]
    %v255 = vld [vmem:[#allocation7 + $0x24c] sm:$0xff]
    %v256 = vld [vmem:[#allocation7 + $0x254] sm:$0xff]
    %v257 = vld [vmem:[#allocation7 + $0x25c] sm:$0xff]
    %v258 = vld [vmem:[#allocation7 + $0x264] sm:$0xf]
    %v259 = vld [vmem:[#allocation7 + $0x268] sm:$0xff]
    %v260 = vld [vmem:[#allocation7 + $0x270] sm:$0xff]
    %v261 = vld [vmem:[#allocation7 + $0x278] sm:$0xff]
    %v262 = vld [vmem:[#allocation7 + $0x280] sm:$0xf]
    %v263 = vld [vmem:[#allocation7 + $0x284] sm:$0xff]
    %v264 = vld [vmem:[#allocation7 + $0x28c] sm:$0xff]
    %v265 = vld [vmem:[#allocation7 + $0x294] sm:$0xff]
    %v266 = vld [vmem:[#allocation7 + $0x29c] sm:$0xf]
    %v267 = vld [vmem:[#allocation7 + $0x2a0] sm:$0xff]
    %v268 = vld [vmem:[#allocation7 + $0x2a8] sm:$0xff]
    %v269 = vld [vmem:[#allocation7 + $0x2b0] sm:$0xff]
    %v270 = vld [vmem:[#allocation7 + $0x2b8] sm:$0xf]
    %v271 = vld [vmem:[#allocation7 + $0x2bc] sm:$0xff]
    %v272 = vld [vmem:[#allocation7 + $0x2c4] sm:$0xff]
    %v273 = vld [vmem:[#allocation7 + $0x2cc] sm:$0xff]
    %v274 = vld [vmem:[#allocation7 + $0x2d4] sm:$0xf]
    %v275 = vld [vmem:[#allocation7 + $0x2d8] sm:$0xff]
    %v276 = vld [vmem:[#allocation7 + $0x2e0] sm:$0xff]
    %v277 = vld [vmem:[#allocation7 + $0x2e8] sm:$0xff]
    %v278 = vld [vmem:[#allocation7 + $0x2f0] sm:$0xf]
    %v279 = vld [vmem:[#allocation7 + $0x2f4] sm:$0xff]
    %v280 = vld [vmem:[#allocation7 + $0x2fc] sm:$0xff]
    %v281 = vld [vmem:[#allocation7 + $0x304] sm:$0xff]
    %v282 = vld [vmem:[#allocation7 + $0x30c] sm:$0xf]
    %v283 = vld [vmem:[#allocation7 + $0x310] sm:$0xff]
    %v284 = vld [vmem:[#allocation7 + $0x318] sm:$0xff]
    %v285 = vld [vmem:[#allocation7 + $0x320] sm:$0xff]
    %v286 = vld [vmem:[#allocation7 + $0x328] sm:$0xf]
    %v287 = vld [vmem:[#allocation7 + $0x32c] sm:$0xff]
    %v288 = vld [vmem:[#allocation7 + $0x334] sm:$0xff]
    %v289 = vld [vmem:[#allocation7 + $0x33c] sm:$0xff]
    %v290 = vld [vmem:[#allocation7 + $0x344] sm:$0xf]
    %v291 = vld [vmem:[#allocation7 + $0x348] sm:$0xff]
    %v292 = vld [vmem:[#allocation7 + $0x350] sm:$0xff]
    %v293 = vld [vmem:[#allocation7 + $0x358] sm:$0xff]
    %v294 = vld [vmem:[#allocation7 + $0x360] sm:$0xf]
    %v295 = vld [vmem:[#allocation7 + $0x364] sm:$0xff]
    %v296 = vld [vmem:[#allocation7 + $0x36c] sm:$0xff]
    %v297 = vld [vmem:[#allocation7 + $0x374] sm:$0xff]
    %v298 = vld [vmem:[#allocation7 + $0x37c] sm:$0xf]
    %v299 = vld [vmem:[%s4] sm:$0xff]
    %v301 = vlaneseq
    %v302 = vshrl.u32 %v301, 7
    %v303 = vsub.s32 0, %v302
    %v304 = vrot.slane %v299, %v303
    %v305 = vlaneseq
    %v306 = vshrl.u32 %v305, 7
    %v307 = vsub.s32 1, %v306
    %v308 = vrot.slane %v299, %v307
    %v309 = vlaneseq
    %v310 = vshrl.u32 %v309, 7
    %v311 = vsub.s32 2, %v310
    %v312 = vrot.slane %v299, %v311
    %v313 = vlaneseq
    %v314 = vshrl.u32 %v313, 7
    %v315 = vsub.s32 3, %v314
    %v316 = vrot.slane %v299, %v315
    %v317 = vlaneseq
    %v318 = vshrl.u32 %v317, 7
    %v319 = vsub.s32 4, %v318
    %v320 = vrot.slane %v299, %v319
    %v321 = vlaneseq
    %v322 = vshrl.u32 %v321, 7
    %v323 = vsub.s32 5, %v322
    %v324 = vrot.slane %v299, %v323
    %v325 = vlaneseq
    %v326 = vshrl.u32 %v325, 7
    %v327 = vsub.s32 6, %v326
    %v328 = vrot.slane %v299, %v327
    %v464 = vunpack.c.l.b16 %v171
    %v465 = vunpack.c.h.b16 %v171
    %v466 = vunpack.c.l.b16 %v172
    %v467 = vunpack.c.h.b16 %v172
    %v468 = vunpack.c.l.b16 %v173
    %v469 = vunpack.c.h.b16 %v173
    %v470 = vunpack.c.l.b16 %v174
    %v471 = vunpack.c.l.b16 %v175
    %v472 = vunpack.c.h.b16 %v175
    %v473 = vunpack.c.l.b16 %v176
    %v474 = vunpack.c.h.b16 %v176
    %v475 = vunpack.c.l.b16 %v177
    %v476 = vunpack.c.h.b16 %v177
    %v477 = vunpack.c.l.b16 %v178
    %v478 = vunpack.c.l.b16 %v179
    %v479 = vunpack.c.h.b16 %v179
    %v480 = vunpack.c.l.b16 %v180
    %v481 = vunpack.c.h.b16 %v180
    %v482 = vunpack.c.l.b16 %v181
    %v483 = vunpack.c.h.b16 %v181
    %v484 = vunpack.c.l.b16 %v182
    %v485 = vunpack.c.l.b16 %v183
    %v486 = vunpack.c.h.b16 %v183
    %v487 = vunpack.c.l.b16 %v184
    %v488 = vunpack.c.h.b16 %v184
    %v489 = vunpack.c.l.b16 %v185
    %v490 = vunpack.c.h.b16 %v185
    %v491 = vunpack.c.l.b16 %v186
    %v492 = vunpack.c.l.b16 %v187
    %v493 = vunpack.c.h.b16 %v187
    %v494 = vunpack.c.l.b16 %v188
    %v495 = vunpack.c.h.b16 %v188
    %v496 = vunpack.c.l.b16 %v189
    %v497 = vunpack.c.h.b16 %v189
    %v498 = vunpack.c.l.b16 %v190
    %v499 = vunpack.c.l.b16 %v191
    %v500 = vunpack.c.h.b16 %v191
    %v501 = vunpack.c.l.b16 %v192
    %v502 = vunpack.c.h.b16 %v192
    %v503 = vunpack.c.l.b16 %v193
    %v504 = vunpack.c.h.b16 %v193
    %v505 = vunpack.c.l.b16 %v194
    %v506 = vunpack.c.l.b16 %v195
    %v507 = vunpack.c.h.b16 %v195
    %v508 = vunpack.c.l.b16 %v196
    %v509 = vunpack.c.h.b16 %v196
    %v510 = vunpack.c.l.b16 %v197
    %v511 = vunpack.c.h.b16 %v197
    %v512 = vunpack.c.l.b16 %v198
    %v513 = vunpack.c.l.b16 %v199
    %v514 = vunpack.c.h.b16 %v199
    %v515 = vunpack.c.l.b16 %v200
    %v516 = vunpack.c.h.b16 %v200
    %v517 = vunpack.c.l.b16 %v201
    %v518 = vunpack.c.h.b16 %v201
    %v519 = vunpack.c.l.b16 %v202
    %v520 = vunpack.c.l.b16 %v203
    %v521 = vunpack.c.h.b16 %v203
    %v522 = vunpack.c.l.b16 %v204
    %v523 = vunpack.c.h.b16 %v204
    %v524 = vunpack.c.l.b16 %v205
    %v525 = vunpack.c.h.b16 %v205
    %v526 = vunpack.c.l.b16 %v206
    %v527 = vunpack.c.l.b16 %v207
    %v528 = vunpack.c.h.b16 %v207
    %v529 = vunpack.c.l.b16 %v208
    %v530 = vunpack.c.h.b16 %v208
    %v531 = vunpack.c.l.b16 %v209
    %v532 = vunpack.c.h.b16 %v209
    %v533 = vunpack.c.l.b16 %v210
    %v534 = vunpack.c.l.b16 %v211
    %v535 = vunpack.c.h.b16 %v211
    %v536 = vunpack.c.l.b16 %v212
    %v537 = vunpack.c.h.b16 %v212
    %v538 = vunpack.c.l.b16 %v213
    %v539 = vunpack.c.h.b16 %v213
    %v540 = vunpack.c.l.b16 %v214
    %v541 = vunpack.c.l.b16 %v215
    %v542 = vunpack.c.h.b16 %v215
    %v543 = vunpack.c.l.b16 %v216
    %v544 = vunpack.c.h.b16 %v216
    %v545 = vunpack.c.l.b16 %v217
    %v546 = vunpack.c.h.b16 %v217
    %v547 = vunpack.c.l.b16 %v218
    %v548 = vunpack.c.l.b16 %v219
    %v549 = vunpack.c.h.b16 %v219
    %v550 = vunpack.c.l.b16 %v220
    %v551 = vunpack.c.h.b16 %v220
    %v552 = vunpack.c.l.b16 %v221
    %v553 = vunpack.c.h.b16 %v221
    %v554 = vunpack.c.l.b16 %v222
    %v555 = vunpack.c.l.b16 %v223
    %v556 = vunpack.c.h.b16 %v223
    %v557 = vunpack.c.l.b16 %v224
    %v558 = vunpack.c.h.b16 %v224
    %v559 = vunpack.c.l.b16 %v225
    %v560 = vunpack.c.h.b16 %v225
    %v561 = vunpack.c.l.b16 %v226
    %v562 = vunpack.c.l.b16 %v227
    %v563 = vunpack.c.h.b16 %v227
    %v564 = vunpack.c.l.b16 %v228
    %v565 = vunpack.c.h.b16 %v228
    %v566 = vunpack.c.l.b16 %v229
    %v567 = vunpack.c.h.b16 %v229
    %v568 = vunpack.c.l.b16 %v230
    %v569 = vunpack.c.l.b16 %v231
    %v570 = vunpack.c.h.b16 %v231
    %v571 = vunpack.c.l.b16 %v232
    %v572 = vunpack.c.h.b16 %v232
    %v573 = vunpack.c.l.b16 %v233
    %v574 = vunpack.c.h.b16 %v233
    %v575 = vunpack.c.l.b16 %v234
    %v576 = vunpack.c.l.b16 %v235
    %v577 = vunpack.c.h.b16 %v235
    %v578 = vunpack.c.l.b16 %v236
    %v579 = vunpack.c.h.b16 %v236
    %v580 = vunpack.c.l.b16 %v237
    %v581 = vunpack.c.h.b16 %v237
    %v582 = vunpack.c.l.b16 %v238
    %v583 = vunpack.c.l.b16 %v239
    %v584 = vunpack.c.h.b16 %v239
    %v585 = vunpack.c.l.b16 %v240
    %v586 = vunpack.c.h.b16 %v240
    %v587 = vunpack.c.l.b16 %v241
    %v588 = vunpack.c.h.b16 %v241
    %v589 = vunpack.c.l.b16 %v242
    %v590 = vunpack.c.l.b16 %v243
    %v591 = vunpack.c.h.b16 %v243
    %v592 = vunpack.c.l.b16 %v244
    %v593 = vunpack.c.h.b16 %v244
    %v594 = vunpack.c.l.b16 %v245
    %v595 = vunpack.c.h.b16 %v245
    %v596 = vunpack.c.l.b16 %v246
    %v597 = vunpack.c.l.b16 %v247
    %v598 = vunpack.c.h.b16 %v247
    %v599 = vunpack.c.l.b16 %v248
    %v600 = vunpack.c.h.b16 %v248
    %v601 = vunpack.c.l.b16 %v249
    %v602 = vunpack.c.h.b16 %v249
    %v603 = vunpack.c.l.b16 %v250
    %v604 = vunpack.c.l.b16 %v251
    %v605 = vunpack.c.h.b16 %v251
    %v606 = vunpack.c.l.b16 %v252
    %v607 = vunpack.c.h.b16 %v252
    %v608 = vunpack.c.l.b16 %v253
    %v609 = vunpack.c.h.b16 %v253
    %v610 = vunpack.c.l.b16 %v254
    %v611 = vunpack.c.l.b16 %v255
    %v612 = vunpack.c.h.b16 %v255
    %v613 = vunpack.c.l.b16 %v256
    %v614 = vunpack.c.h.b16 %v256
    %v615 = vunpack.c.l.b16 %v257
    %v616 = vunpack.c.h.b16 %v257
    %v617 = vunpack.c.l.b16 %v258
    %v618 = vunpack.c.l.b16 %v259
    %v619 = vunpack.c.h.b16 %v259
    %v620 = vunpack.c.l.b16 %v260
    %v621 = vunpack.c.h.b16 %v260
    %v622 = vunpack.c.l.b16 %v261
    %v623 = vunpack.c.h.b16 %v261
    %v624 = vunpack.c.l.b16 %v262
    %v625 = vunpack.c.l.b16 %v263
    %v626 = vunpack.c.h.b16 %v263
    %v627 = vunpack.c.l.b16 %v264
    %v628 = vunpack.c.h.b16 %v264
    %v629 = vunpack.c.l.b16 %v265
    %v630 = vunpack.c.h.b16 %v265
    %v631 = vunpack.c.l.b16 %v266
    %v632 = vunpack.c.l.b16 %v267
    %v633 = vunpack.c.h.b16 %v267
    %v634 = vunpack.c.l.b16 %v268
    %v635 = vunpack.c.h.b16 %v268
    %v636 = vunpack.c.l.b16 %v269
    %v637 = vunpack.c.h.b16 %v269
    %v638 = vunpack.c.l.b16 %v270
    %v639 = vunpack.c.l.b16 %v271
    %v640 = vunpack.c.h.b16 %v271
    %v641 = vunpack.c.l.b16 %v272
    %v642 = vunpack.c.h.b16 %v272
    %v643 = vunpack.c.l.b16 %v273
    %v644 = vunpack.c.h.b16 %v273
    %v645 = vunpack.c.l.b16 %v274
    %v646 = vunpack.c.l.b16 %v275
    %v647 = vunpack.c.h.b16 %v275
    %v648 = vunpack.c.l.b16 %v276
    %v649 = vunpack.c.h.b16 %v276
    %v650 = vunpack.c.l.b16 %v277
    %v651 = vunpack.c.h.b16 %v277
    %v652 = vunpack.c.l.b16 %v278
    %v653 = vunpack.c.l.b16 %v279
    %v654 = vunpack.c.h.b16 %v279
    %v655 = vunpack.c.l.b16 %v280
    %v656 = vunpack.c.h.b16 %v280
    %v657 = vunpack.c.l.b16 %v281
    %v658 = vunpack.c.h.b16 %v281
    %v659 = vunpack.c.l.b16 %v282
    %v660 = vunpack.c.l.b16 %v283
    %v661 = vunpack.c.h.b16 %v283
    %v662 = vunpack.c.l.b16 %v284
    %v663 = vunpack.c.h.b16 %v284
    %v664 = vunpack.c.l.b16 %v285
    %v665 = vunpack.c.h.b16 %v285
    %v666 = vunpack.c.l.b16 %v286
    %v667 = vunpack.c.l.b16 %v287
    %v668 = vunpack.c.h.b16 %v287
    %v669 = vunpack.c.l.b16 %v288
    %v670 = vunpack.c.h.b16 %v288
    %v671 = vunpack.c.l.b16 %v289
    %v672 = vunpack.c.h.b16 %v289
    %v673 = vunpack.c.l.b16 %v290
    %v674 = vunpack.c.l.b16 %v291
    %v675 = vunpack.c.h.b16 %v291
    %v676 = vunpack.c.l.b16 %v292
    %v677 = vunpack.c.h.b16 %v292
    %v678 = vunpack.c.l.b16 %v293
    %v679 = vunpack.c.h.b16 %v293
    %v680 = vunpack.c.l.b16 %v294
    %v681 = vunpack.c.l.b16 %v295
    %v682 = vunpack.c.h.b16 %v295
    %v683 = vunpack.c.l.b16 %v296
    %v684 = vunpack.c.h.b16 %v296
    %v685 = vunpack.c.l.b16 %v297
    %v686 = vunpack.c.h.b16 %v297
    %v687 = vunpack.c.l.b16 %v298
    %v688 = vpack.c.b16 %v471, %v464
    %v689 = vpack.c.b16 %v472, %v465
    %v690 = vpack.c.b16 %v473, %v466
    %v691 = vpack.c.b16 %v474, %v467
    %v692 = vpack.c.b16 %v475, %v468
    %v693 = vpack.c.b16 %v476, %v469
    %v694 = vpack.c.b16 %v477, %v470
    %v695 = vpack.c.b16 %v485, %v478
    %v696 = vpack.c.b16 %v486, %v479
    %v697 = vpack.c.b16 %v487, %v480
    %v698 = vpack.c.b16 %v488, %v481
    %v699 = vpack.c.b16 %v489, %v482
    %v700 = vpack.c.b16 %v490, %v483
    %v701 = vpack.c.b16 %v491, %v484
    %v702 = vpack.c.b16 %v499, %v492
    %v703 = vpack.c.b16 %v500, %v493
    %v704 = vpack.c.b16 %v501, %v494
    %v705 = vpack.c.b16 %v502, %v495
    %v706 = vpack.c.b16 %v503, %v496
    %v707 = vpack.c.b16 %v504, %v497
    %v708 = vpack.c.b16 %v505, %v498
    %v709 = vpack.c.b16 %v513, %v506
    %v710 = vpack.c.b16 %v514, %v507
    %v711 = vpack.c.b16 %v515, %v508
    %v712 = vpack.c.b16 %v516, %v509
    %v713 = vpack.c.b16 %v517, %v510
    %v714 = vpack.c.b16 %v518, %v511
    %v715 = vpack.c.b16 %v519, %v512
    %v716 = vpack.c.b16 %v527, %v520
    %v717 = vpack.c.b16 %v528, %v521
    %v718 = vpack.c.b16 %v529, %v522
    %v719 = vpack.c.b16 %v530, %v523
    %v720 = vpack.c.b16 %v531, %v524
    %v721 = vpack.c.b16 %v532, %v525
    %v722 = vpack.c.b16 %v533, %v526
    %v723 = vpack.c.b16 %v541, %v534
    %v724 = vpack.c.b16 %v542, %v535
    %v725 = vpack.c.b16 %v543, %v536
    %v726 = vpack.c.b16 %v544, %v537
    %v727 = vpack.c.b16 %v545, %v538
    %v728 = vpack.c.b16 %v546, %v539
    %v729 = vpack.c.b16 %v547, %v540
    %v730 = vpack.c.b16 %v555, %v548
    %v731 = vpack.c.b16 %v556, %v549
    %v732 = vpack.c.b16 %v557, %v550
    %v733 = vpack.c.b16 %v558, %v551
    %v734 = vpack.c.b16 %v559, %v552
    %v735 = vpack.c.b16 %v560, %v553
    %v736 = vpack.c.b16 %v561, %v554
    %v737 = vpack.c.b16 %v569, %v562
    %v738 = vpack.c.b16 %v570, %v563
    %v739 = vpack.c.b16 %v571, %v564
    %v740 = vpack.c.b16 %v572, %v565
    %v741 = vpack.c.b16 %v573, %v566
    %v742 = vpack.c.b16 %v574, %v567
    %v743 = vpack.c.b16 %v575, %v568
    %v744 = vpack.c.b16 %v583, %v576
    %v745 = vpack.c.b16 %v584, %v577
    %v746 = vpack.c.b16 %v585, %v578
    %v747 = vpack.c.b16 %v586, %v579
    %v748 = vpack.c.b16 %v587, %v580
    %v749 = vpack.c.b16 %v588, %v581
    %v750 = vpack.c.b16 %v589, %v582
    %v751 = vpack.c.b16 %v597, %v590
    %v752 = vpack.c.b16 %v598, %v591
    %v753 = vpack.c.b16 %v599, %v592
    %v754 = vpack.c.b16 %v600, %v593
    %v755 = vpack.c.b16 %v601, %v594
    %v756 = vpack.c.b16 %v602, %v595
    %v757 = vpack.c.b16 %v603, %v596
    %v758 = vpack.c.b16 %v611, %v604
    %v759 = vpack.c.b16 %v612, %v605
    %v760 = vpack.c.b16 %v613, %v606
    %v761 = vpack.c.b16 %v614, %v607
    %v762 = vpack.c.b16 %v615, %v608
    %v763 = vpack.c.b16 %v616, %v609
    %v764 = vpack.c.b16 %v617, %v610
    %v765 = vpack.c.b16 %v625, %v618
    %v766 = vpack.c.b16 %v626, %v619
    %v767 = vpack.c.b16 %v627, %v620
    %v768 = vpack.c.b16 %v628, %v621
    %v769 = vpack.c.b16 %v629, %v622
    %v770 = vpack.c.b16 %v630, %v623
    %v771 = vpack.c.b16 %v631, %v624
    %v772 = vpack.c.b16 %v639, %v632
    %v773 = vpack.c.b16 %v640, %v633
    %v774 = vpack.c.b16 %v641, %v634
    %v775 = vpack.c.b16 %v642, %v635
    %v776 = vpack.c.b16 %v643, %v636
    %v777 = vpack.c.b16 %v644, %v637
    %v778 = vpack.c.b16 %v645, %v638
    %v779 = vpack.c.b16 %v653, %v646
    %v780 = vpack.c.b16 %v654, %v647
    %v781 = vpack.c.b16 %v655, %v648
    %v782 = vpack.c.b16 %v656, %v649
    %v783 = vpack.c.b16 %v657, %v650
    %v784 = vpack.c.b16 %v658, %v651
    %v785 = vpack.c.b16 %v659, %v652
    %v786 = vpack.c.b16 %v667, %v660
    %v787 = vpack.c.b16 %v668, %v661
    %v788 = vpack.c.b16 %v669, %v662
    %v789 = vpack.c.b16 %v670, %v663
    %v790 = vpack.c.b16 %v671, %v664
    %v791 = vpack.c.b16 %v672, %v665
    %v792 = vpack.c.b16 %v673, %v666
    %v793 = vpack.c.b16 %v681, %v674
    %v794 = vpack.c.b16 %v682, %v675
    %v795 = vpack.c.b16 %v683, %v676
    %v796 = vpack.c.b16 %v684, %v677
    %v797 = vpack.c.b16 %v685, %v678
    %v798 = vpack.c.b16 %v686, %v679
    %v799 = vpack.c.b16 %v687, %v680
    %912 = vmatprep.subr.bf16.mxu0 %v689
    %913 = vmatpush1.bf16.msra.mxu0 %v688
    %914 = vmatprep.subr.bf16.mxu0 %v696
    %915 = vmatpush1.bf16.msra.mxu0 %v695
    %916 = vmatprep.subr.bf16.mxu0 %v703
    %917 = vmatpush1.bf16.msra.mxu0 %v702
    %918 = vmatprep.subr.bf16.mxu0 %v710
    %919 = vmatpush1.bf16.msra.mxu0 %v709
    %920 = vmatprep.subr.bf16.mxu0 %v717
    %921 = vmatpush1.bf16.msra.mxu0 %v716
    %922 = vmatprep.subr.bf16.mxu0 %v724
    %923 = vmatpush1.bf16.msra.mxu0 %v723
    %924 = vmatprep.subr.bf16.mxu0 %v731
    %925 = vmatpush1.bf16.msra.mxu0 %v730
    %926 = vmatprep.subr.bf16.mxu0 %v738
    %927 = vmatpush1.bf16.msra.mxu0 %v737
    %928 = vmatprep.subr.bf16.mxu0 %v745
    %929 = vmatpush1.bf16.msra.mxu0 %v744
    %930 = vmatprep.subr.bf16.mxu0 %v752
    %931 = vmatpush1.bf16.msra.mxu0 %v751
    %932 = vmatprep.subr.bf16.mxu0 %v759
    %933 = vmatpush1.bf16.msra.mxu0 %v758
    %934 = vmatprep.subr.bf16.mxu0 %v766
    %935 = vmatpush1.bf16.msra.mxu0 %v765
    %936 = vmatprep.subr.bf16.mxu0 %v773
    %937 = vmatpush1.bf16.msra.mxu0 %v772
    %938 = vmatprep.subr.bf16.mxu0 %v780
    %939 = vmatpush1.bf16.msra.mxu0 %v779
    %940 = vmatprep.subr.bf16.mxu0 %v787
    %941 = vmatpush1.bf16.msra.mxu0 %v786
    %942 = vmatprep.subr.bf16.mxu0 %v794
    %943 = vmatpush1.bf16.msra.mxu0 %v793
    %944 = vmatprep.mubr.bf16.mxu0 %v170
    %945 = vmatmul.mubr.bf16.gmra.mrb[0].mxu0 %v169
    %v946 = vpop.f32.mrb[0].mxu0
    %v947 = vadd.f32 %v304, %v946
    %v948 = vpop.f32.mrb[0].mxu0
    %v949 = vadd.f32 %v308, %v948
    %v950 = vpop.f32.mrb[0].mxu0
    %v951 = vpop.f32.mrb[0].mxu0
    %952 = vdwg.mxu0
    %953 = vmatprep.subr.bf16.mxu0 %v691
    %954 = vmatpush1.bf16.msra.mxu0 %v690
    %955 = vmatprep.subr.bf16.mxu0 %v698
    %956 = vmatpush1.bf16.msra.mxu0 %v697
    %957 = vmatprep.subr.bf16.mxu0 %v705
    %958 = vmatpush1.bf16.msra.mxu0 %v704
    %959 = vmatprep.subr.bf16.mxu0 %v712
    %960 = vmatpush1.bf16.msra.mxu0 %v711
    %961 = vmatprep.subr.bf16.mxu0 %v719
    %962 = vmatpush1.bf16.msra.mxu0 %v718
    %963 = vmatprep.subr.bf16.mxu0 %v726
    %964 = vmatpush1.bf16.msra.mxu0 %v725
    %965 = vmatprep.subr.bf16.mxu0 %v733
    %966 = vmatpush1.bf16.msra.mxu0 %v732
    %967 = vmatprep.subr.bf16.mxu0 %v740
    %968 = vmatpush1.bf16.msra.mxu0 %v739
    %969 = vmatprep.subr.bf16.mxu0 %v747
    %970 = vmatpush1.bf16.msra.mxu0 %v746
    %971 = vmatprep.subr.bf16.mxu0 %v754
    %972 = vmatpush1.bf16.msra.mxu0 %v753
    %973 = vmatprep.subr.bf16.mxu0 %v761
    %974 = vmatpush1.bf16.msra.mxu0 %v760
    %975 = vmatprep.subr.bf16.mxu0 %v768
    %976 = vmatpush1.bf16.msra.mxu0 %v767
    %977 = vmatprep.subr.bf16.mxu0 %v775
    %978 = vmatpush1.bf16.msra.mxu0 %v774
    %979 = vmatprep.subr.bf16.mxu0 %v782
    %980 = vmatpush1.bf16.msra.mxu0 %v781
    %981 = vmatprep.subr.bf16.mxu0 %v789
    %982 = vmatpush1.bf16.msra.mxu0 %v788
    %983 = vmatprep.subr.bf16.mxu0 %v796
    %984 = vmatpush1.bf16.msra.mxu0 %v795
    %985 = vmatprep.mubr.bf16.mxu0 %v170
    %986 = vmatmul.mubr.bf16.gmra.mrb[0].mxu0 %v169
    %v987 = vpop.f32.mrb[0].mxu0
    %v988 = vadd.f32 %v312, %v987
    %v989 = vpop.f32.mrb[0].mxu0
    %v990 = vadd.f32 %v316, %v989
    %v991 = vpop.f32.mrb[0].mxu0
    %v992 = vpop.f32.mrb[0].mxu0
    %993 = vdwg.mxu0
    %994 = vmatprep.subr.bf16.mxu0 %v693
    %995 = vmatpush1.bf16.msra.mxu0 %v692
    %996 = vmatprep.subr.bf16.mxu0 %v700
    %997 = vmatpush1.bf16.msra.mxu0 %v699
    %998 = vmatprep.subr.bf16.mxu0 %v707
    %999 = vmatpush1.bf16.msra.mxu0 %v706
    %1000 = vmatprep.subr.bf16.mxu0 %v714
    %1001 = vmatpush1.bf16.msra.mxu0 %v713
    %1002 = vmatprep.subr.bf16.mxu0 %v721
    %1003 = vmatpush1.bf16.msra.mxu0 %v720
    %1004 = vmatprep.subr.bf16.mxu0 %v728
    %1005 = vmatpush1.bf16.msra.mxu0 %v727
    %1006 = vmatprep.subr.bf16.mxu0 %v735
    %1007 = vmatpush1.bf16.msra.mxu0 %v734
    %1008 = vmatprep.subr.bf16.mxu0 %v742
    %1009 = vmatpush1.bf16.msra.mxu0 %v741
    %1010 = vmatprep.subr.bf16.mxu0 %v749
    %1011 = vmatpush1.bf16.msra.mxu0 %v748
    %1012 = vmatprep.subr.bf16.mxu0 %v756
    %1013 = vmatpush1.bf16.msra.mxu0 %v755
    %1014 = vmatprep.subr.bf16.mxu0 %v763
    %1015 = vmatpush1.bf16.msra.mxu0 %v762
    %1016 = vmatprep.subr.bf16.mxu0 %v770
    %1017 = vmatpush1.bf16.msra.mxu0 %v769
    %1018 = vmatprep.subr.bf16.mxu0 %v777
    %1019 = vmatpush1.bf16.msra.mxu0 %v776
    %1020 = vmatprep.subr.bf16.mxu0 %v784
    %1021 = vmatpush1.bf16.msra.mxu0 %v783
    %1022 = vmatprep.subr.bf16.mxu0 %v791
    %1023 = vmatpush1.bf16.msra.mxu0 %v790
    %1024 = vmatprep.subr.bf16.mxu0 %v798
    %1025 = vmatpush1.bf16.msra.mxu0 %v797
    %1026 = vmatprep.mubr.bf16.mxu0 %v170
    %1027 = vmatmul.mubr.bf16.gmra.mrb[0].mxu0 %v169
    %v1028 = vpop.f32.mrb[0].mxu0
    %v1029 = vadd.f32 %v320, %v1028
    %v1030 = vpop.f32.mrb[0].mxu0
    %v1031 = vadd.f32 %v324, %v1030
    %v1032 = vpop.f32.mrb[0].mxu0
    %v1033 = vpop.f32.mrb[0].mxu0
    %1034 = vdwg.mxu0
    %1035 = vmatprep.subr.bf16.mxu0 0
    %1036 = vmatpush1.bf16.msra.mxu0 %v694
    %1037 = vmatprep.subr.bf16.mxu0 0
    %1038 = vmatpush1.bf16.msra.mxu0 %v701
    %1039 = vmatprep.subr.bf16.mxu0 0
    %1040 = vmatpush1.bf16.msra.mxu0 %v708
    %1041 = vmatprep.subr.bf16.mxu0 0
    %1042 = vmatpush1.bf16.msra.mxu0 %v715
    %1043 = vmatprep.subr.bf16.mxu0 0
    %1044 = vmatpush1.bf16.msra.mxu0 %v722
    %1045 = vmatprep.subr.bf16.mxu0 0
    %1046 = vmatpush1.bf16.msra.mxu0 %v729
    %1047 = vmatprep.subr.bf16.mxu0 0
    %1048 = vmatpush1.bf16.msra.mxu0 %v736
    %1049 = vmatprep.subr.bf16.mxu0 0
    %1050 = vmatpush1.bf16.msra.mxu0 %v743
    %1051 = vmatprep.subr.bf16.mxu0 0
    %1052 = vmatpush1.bf16.msra.mxu0 %v750
    %1053 = vmatprep.subr.bf16.mxu0 0
    %1054 = vmatpush1.bf16.msra.mxu0 %v757
    %1055 = vmatprep.subr.bf16.mxu0 0
    %1056 = vmatpush1.bf16.msra.mxu0 %v764
    %1057 = vmatprep.subr.bf16.mxu0 0
    %1058 = vmatpush1.bf16.msra.mxu0 %v771
    %1059 = vmatprep.subr.bf16.mxu0 0
    %1060 = vmatpush1.bf16.msra.mxu0 %v778
    %1061 = vmatprep.subr.bf16.mxu0 0
    %1062 = vmatpush1.bf16.msra.mxu0 %v785
    %1063 = vmatprep.subr.bf16.mxu0 0
    %1064 = vmatpush1.bf16.msra.mxu0 %v792
    %1065 = vmatprep.subr.bf16.mxu0 0
    %1066 = vmatpush1.bf16.msra.mxu0 %v799
    %1067 = vmatprep.mubr.bf16.mxu0 %v170
    %1068 = vmatmul.mubr.bf16.gmra.mrb[0].mxu0 %v169
    %v1069 = vpop.f32.mrb[0].mxu0
    %v1070 = vadd.f32 %v328, %v1069
    %v1071 = vpop.f32.mrb[0].mxu0
    %v1072 = vpop.f32.mrb[0].mxu0
    %v1073 = vpop.f32.mrb[0].mxu0
    %1074 = vdwg.mxu0
    %v1075 = vxor.u32 %v947, 2147483648
    %v1076 = vxor.u32 %v949, 2147483648
    %v1077 = vxor.u32 %v988, 2147483648
    %v1078 = vxor.u32 %v990, 2147483648
    %v1079 = vxor.u32 %v1029, 2147483648
    %v1080 = vxor.u32 %v1031, 2147483648
    %v1081 = vxor.u32 %v1070, 2147483648
    %v1082 = vmul.f32 %v1075, 1.442695
    %v1083 = vpow.pop %v1082
    %v1084 = vmul.f32 %v1076, 1.442695
    %v1085 = vpow.pop %v1084
    %v1086 = vmul.f32 %v1077, 1.442695
    %v1087 = vpow.pop %v1086
    %v1088 = vmul.f32 %v1078, 1.442695
    %v1089 = vpow.pop %v1088
    %v1090 = vmul.f32 %v1079, 1.442695
    %v1091 = vpow.pop %v1090
    %v1092 = vmul.f32 %v1080, 1.442695
    %v1093 = vpow.pop %v1092
    %v1094 = vmul.f32 %v1081, 1.442695
    %v1095 = vpow.pop %v1094
    %v1096 = vadd.f32 %v1083, 1.0
    %v1097 = vadd.f32 %v1085, 1.0
    %v1098 = vadd.f32 %v1087, 1.0
    %v1099 = vadd.f32 %v1089, 1.0
    %v1100 = vadd.f32 %v1091, 1.0
    %v1101 = vadd.f32 %v1093, 1.0
    %v1102 = vadd.f32 %v1095, 1.0
    %v1103 = vrcp.pop %v1096
    %v1104 = vmul.f32 1.0, %v1103
    %v1105 = vrcp.pop %v1097
    %v1106 = vmul.f32 1.0, %v1105
    %v1107 = vrcp.pop %v1098
    %v1108 = vmul.f32 1.0, %v1107
    %v1109 = vrcp.pop %v1099
    %v1110 = vmul.f32 1.0, %v1109
    %v1111 = vrcp.pop %v1100
    %v1112 = vmul.f32 1.0, %v1111
    %v1113 = vrcp.pop %v1101
    %v1114 = vmul.f32 1.0, %v1113
    %v1115 = vrcp.pop %v1102
    %v1116 = vmul.f32 1.0, %v1115
    %1117 = vst [vmem:[#allocation8] sm:$0xff] %v1104
    %1118 = vst [vmem:[#allocation8 + $0x8] sm:$0xff] %v1106
    %1119 = vst [vmem:[#allocation8 + $0x10] sm:$0xff] %v1108
    %1120 = vst [vmem:[#allocation8 + $0x18] sm:$0xff] %v1110
    %1121 = vst [vmem:[#allocation8 + $0x20] sm:$0xff] %v1112
    %1122 = vst [vmem:[#allocation8 + $0x28] sm:$0xff] %v1114
    %1123 = vst [vmem:[#allocation8 + $0x30] sm:$0xff] %v1116
    // Predicated region
    $region34: #{tpu_custom_call.1} parent=1 // pred_check
      _
    $region35: #{tpu_custom_call.1} parent=1 // pred_check_branch
      %1125 = sbr.rel (0) target = $region37
    $region36: #{tpu_custom_call.1} parent=1 // pred_region
      %s1127 = ssub.s32 896, 896
      %1128 = vsyncadd [#allocation4], %s1127
      %s1130 = sshll.u32 [#allocation8], 4
      %s1131 = int_to_ptr.vmem [resolvable:$true] %s1130
      %1133 = dma.vmem_to_hbm [thread:$0]  %s1131, 896, %s5, [#allocation4]
    $region37: #{tpu_custom_call.1} parent=1 // pred_fallthru
      _
    // Predicated region
    $region38: #{tpu_custom_call.1} parent=1 // pred_check
      _
    $region39: #{tpu_custom_call.1} parent=1 // pred_check_branch
      %1135 = sbr.rel (0) target = $region41
    $region40: #{tpu_custom_call.1} parent=1 // pred_region
      %1136 = dma.done [#allocation4], 896
    $region41: #{tpu_custom_call.1} parent=1 // pred_fallthru
      _
    %1137 = vsyncpa [#allocation3], 1
    %1138 = vsyncpa [#allocation6], 1
    %1139 = vsyncpa [#allocation4], 1

</llo_original>
